<compile_context>
chip_gen: v6e
topology: v6e:2x2x1
jax: 0.10.0
libtpu: 0.0.40
codegen_flags: <defaults>
</compile_context>

<pallas_src>
import functools

import jax
import jax.numpy as jnp
from jax.experimental import pallas as pl
from jax.experimental.pallas import tpu as pltpu


def _resblock_kernel(K1, K2, H, lhs1_ref, R1_ref, b1_ref, R2_ref, b2_ref, o_ref):
    """Whole batch in one grid step (all operands lane-dense).

    lhs1_ref : [N*H, K1*W*Cin]          conv1 im2col rows (bf16, H-pad baked in)
    R1_ref   : [K1*W*Cin, W*C0]         conv1 vertical taps stacked on contraction (bf16)
    b1_ref   : [1, W*C0]                conv1 bias tiled across W (f32)
    R2_ref   : [K2*W*C0+(P1+1)*W*Cin, W*C1]  conv2 taps + zero-padded 1x1 shortcut (bf16)
    b2_ref   : [1, W*C1]                conv2 bias tiled across W (f32)
    o_ref    : [N*H, W*C1]              output rows (f32)
    """
    NH = o_ref.shape[0]
    WCin = lhs1_ref.shape[1] // K1
    P1 = (K1 - 1) // 2
    P2 = (K2 - 1) // 2

    lhs1 = lhs1_ref[...]                                  # [NH, K1*WCin] bf16

    # ---- conv1 (+bias, ReLU): one fused im2col MXU matmul -------------------
    acc1 = jnp.dot(lhs1, R1_ref[...], preferred_element_type=jnp.float32)
    h1 = jnp.maximum(acc1 + b1_ref[...], 0.0)             # [NH, W*C0] f32
    # Dropout2d(p=0.0) / batchnorm=False are identities here.

    # ---- conv2 + 1x1 shortcut (+bias, final ReLU): one MXU matmul ------------
    # Vertical 'same' padding of h1 via sublane rolls (XLU) + per-image boundary
    # masks (VPU); images never bleed into each other because masked rows are
    # exactly the ones where the roll crosses an image (or array) boundary.
    hrow = jax.lax.broadcasted_iota(jnp.int32, (NH, 1), 0) % H
    pieces = []
    for dh in range(K2):
        off = dh - P2                                     # vertical tap offset
        if off == 0:
            pieces.append(h1)
        else:
            sh = pltpu.roll(h1, (-off) % NH, axis=0)      # sh[r] = h1[r + off]
            valid = (hrow + off >= 0) & (hrow + off < H)  # stay inside own image
            pieces.append(jnp.where(valid, sh, 0.0))
    # Shortcut slab: lanes [0, (P1+1)*WCin) of lhs1 = [x[h-1] tap | x[h] center];
    # the matching RHS rows are [0 | S], so only the center tap contributes.
    lhs2 = jnp.concatenate(
        [jnp.concatenate(pieces, axis=1).astype(jnp.bfloat16),
         lhs1[:, 0:(P1 + 1) * WCin]], axis=1)             # [NH, K2*WC0+(P1+1)*WCin]

    acc2 = jnp.dot(lhs2, R2_ref[...], preferred_element_type=jnp.float32)
    o_ref[...] = jnp.maximum(acc2 + b2_ref[...], 0.0)     # full-width lane-dense store


def _band_matrices(wk, W):
    """Repack HWIO conv weights [K, K, Cin, Cout] into per-vertical-tap band
    matrices [K, W*Cin, W*Cout] with B[dh, w'*Cin+ci, w*Cout+co] =
    wk[dh, w'-w+P, ci, co] for |w'-w| <= P ('same' W-padding baked in as zeros)."""
    K, _, Cin, Cout = wk.shape
    P = (K - 1) // 2
    shift = jnp.stack(
        [jnp.eye(W, W, k=P - dw, dtype=wk.dtype) for dw in range(K)])  # [K,W,W]
    B = jnp.einsum('dpq,hdio->hpiqo', shift, wk)           # [K, W, Cin, W, Cout]
    return B.reshape(K, W * Cin, W * Cout)


def pack_residual_block(w1, b1, w2, b2, ws, W):
    """One-time weight repack (cache alongside the module's weights)."""
    K1, _, Cin, C0 = w1.shape
    K2, _, _, C1 = w2.shape
    P1 = (K1 - 1) // 2
    WCin, WC0, WC1 = W * Cin, W * C0, W * C1

    B1 = _band_matrices(w1.astype(jnp.float32), W)         # [K1, WCin, WC0]
    B2 = _band_matrices(w2.astype(jnp.float32), W)         # [K2, WC0, WC1]
    S = jnp.einsum('pq,io->piqo', jnp.eye(W, dtype=jnp.float32),
                   ws.astype(jnp.float32)).reshape(WCin, WC1)

    # conv1 RHS: vertical taps stacked along the contraction dim.
    R1 = B1.reshape(K1 * WCin, WC0).astype(jnp.bfloat16)   # [K1*WCin, WC0]
    # conv2 RHS: taps stacked, then the 1x1 shortcut aligned with the lhs1
    # slab (lanes [0, (P1+1)*WCin)): rows for the x[h-1] tap are zero.
    S_pad = jnp.concatenate(
        [jnp.zeros((P1 * WCin, WC1), jnp.float32), S], axis=0)
    R2 = jnp.concatenate([B2.reshape(K2 * WC0, WC1), S_pad],
                         axis=0).astype(jnp.bfloat16)      # [K2*WC0+(P1+1)*WCin, WC1]

    b1row = jnp.tile(b1.astype(jnp.float32), W)[None, :]   # [1, WC0]
    b2row = jnp.tile(b2.astype(jnp.float32), W)[None, :]   # [1, WC1]
    return R1, b1row, R2, b2row


@functools.partial(jax.jit, static_argnames=("K1", "K2"))
def residual_block_rows(x_rows, R1, b1row, R2, b2row, *, K1, K2):
    """Lane-dense forward: x_rows [N, H, W*Cin] f32 -> [N, H, W*C1] f32."""
    N, H, WCin = x_rows.shape
    P1 = (K1 - 1) // 2
    WC0 = R1.shape[1]
    WC1 = R2.shape[1]
    NH = N * H

    # conv1 im2col: stack the K1 vertical taps along lanes; 'same' H padding is
    # baked in per image, so taps never cross image boundaries.
    xpad = jnp.pad(x_rows.astype(jnp.bfloat16), ((0, 0), (P1, P1), (0, 0)))
    lhs1 = jnp.concatenate([xpad[:, dh:dh + H, :] for dh in range(K1)], axis=-1)
    lhs1 = lhs1.reshape(NH, K1 * WCin)                     # [NH, K1*WCin] bf16

    kernel = functools.partial(_resblock_kernel, K1, K2, H)
    out_rows = pl.pallas_call(
        kernel,
        out_shape=jax.ShapeDtypeStruct((NH, WC1), jnp.float32),
        grid=(1,),                                          # single step: whole batch
        in_specs=[
            pl.BlockSpec((NH, K1 * WCin), lambda i: (0, 0)),                 # lhs1
            pl.BlockSpec((K1 * WCin, WC0), lambda i: (0, 0)),                # R1
            pl.BlockSpec((1, WC0), lambda i: (0, 0)),                        # b1 row
            pl.BlockSpec((K2 * WC0 + (P1 + 1) * WCin, WC1), lambda i: (0, 0)),  # R2
            pl.BlockSpec((1, WC1), lambda i: (0, 0)),                        # b2 row
        ],
        out_specs=pl.BlockSpec((NH, WC1), lambda i: (0, 0)),
        compiler_params=pltpu.CompilerParams(
            dimension_semantics=("arbitrary",)),
    )(lhs1, R1, b1row, R2, b2row)
    return out_rows.reshape(N, H, WC1)


def nchw_to_rows(x_nchw):
    N, C, H, W = x_nchw.shape
    return jnp.transpose(x_nchw, (0, 2, 3, 1)).reshape(N, H, W * C)


def rows_to_nchw(rows, C):
    N, H, WC = rows.shape
    W = WC // C
    return jnp.transpose(rows.reshape(N, H, W, C), (0, 3, 1, 2))


def _reference_forward(x_nchw, w1, b1, w2, b2, ws):
    """Pure-JAX reference (lax.conv) mirroring the PyTorch module."""
    x = jnp.transpose(x_nchw, (0, 2, 3, 1))
    dn = ('NHWC', 'HWIO', 'NHWC')
    h1 = jax.lax.conv_general_dilated(x, w1, (1, 1), 'SAME',
                                      dimension_numbers=dn) + b1
    h1 = jnp.maximum(h1, 0.0)
    h2 = jax.lax.conv_general_dilated(h1, w2, (1, 1), 'SAME',
                                      dimension_numbers=dn) + b2
    Cin, C1 = ws.shape
    sc = jax.lax.conv_general_dilated(x, ws.reshape(1, 1, Cin, C1), (1, 1),
                                      'SAME', dimension_numbers=dn)
    out = jnp.maximum(h2 + sc, 0.0)
    return jnp.transpose(out, (0, 3, 1, 2))


if __name__ == "__main__":
    # Small deterministic config: N=2, Cin=4, H=W=16, channels=[8, 8], k=[3, 3].
    N, Cin, H, W = 2, 4, 16, 16
    C0, C1 = 8, 8
    K1, K2 = 3, 3

    key = jax.random.PRNGKey(0)
    kx, k1, kb1, k2, kb2, ks = jax.random.split(key, 6)

    x = jax.random.normal(kx, (N, Cin, H, W), dtype=jnp.float32)
    w1 = jax.random.normal(k1, (K1, K1, Cin, C0), dtype=jnp.float32) * 0.1
    b1 = jax.random.normal(kb1, (C0,), dtype=jnp.float32) * 0.1
    w2 = jax.random.normal(k2, (K2, K2, C0, C1), dtype=jnp.float32) * 0.1
    b2 = jax.random.normal(kb2, (C1,), dtype=jnp.float32) * 0.1
    ws = jax.random.normal(ks, (Cin, C1), dtype=jnp.float32) * 0.1  # 1x1, no bias

    # One-time weight repack (bf16 band matrices), cached with the weights.
    packed = pack_residual_block(w1, b1, w2, b2, ws, W)

    # Lane-dense layout at the module boundary; NCHW conversion done once here.
    x_rows = nchw_to_rows(x)
    out_rows = jax.block_until_ready(
        residual_block_rows(x_rows, *packed, K1=K1, K2=K2))
    out = rows_to_nchw(out_rows, C1)

    ref = jax.block_until_ready(_reference_forward(x, w1, b1, w2, b2, ws))

    assert out.shape == (N, C1, H, W), out.shape
    # bf16 operand storage (native MXU path) vs f32 lax.conv reference: max abs
    # error at these scales is well under 2e-2; exact-f32 parity would need f32
    # storage + precision=HIGHEST, which this latency-bound kernel doesn't need.
    assert jnp.allclose(out, ref, rtol=2e-2, atol=2e-2), \
        float(jnp.max(jnp.abs(out - ref)))

    print("KERNEL_OK")
</pallas_src>

<mosaic_0001>
module attributes {stable_mosaic.version = 11 : i64} {
  func.func @_resblock_kernel(%arg0: i32, %arg1: memref<32x192xbf16, #tpu.memory_space<vmem>>, %arg2: memref<192x128xbf16, #tpu.memory_space<vmem>>, %arg3: memref<1x128xf32, #tpu.memory_space<vmem>>, %arg4: memref<512x128xbf16, #tpu.memory_space<vmem>>, %arg5: memref<1x128xf32, #tpu.memory_space<vmem>>, %arg6: memref<32x128xf32, #tpu.memory_space<vmem>>) attributes {dimension_semantics = [#tpu.dimension_semantics<arbitrary>], iteration_bounds = array<i64: 1>, scalar_prefetch = 0 : i64, scratch_operands = 0 : i64, tpu.core_type = #tpu.core_type<tc>, window_params = [{pipeline_mode = #tpu.pipeline_mode<synchronous>, transform_indices = @transform_0, window_bounds = array<i64: 32, 192>}, {pipeline_mode = #tpu.pipeline_mode<synchronous>, transform_indices = @transform_1, window_bounds = array<i64: 192, 128>}, {pipeline_mode = #tpu.pipeline_mode<synchronous>, transform_indices = @transform_2, window_bounds = array<i64: 1, 128>}, {pipeline_mode = #tpu.pipeline_mode<synchronous>, transform_indices = @transform_3, window_bounds = array<i64: 512, 128>}, {pipeline_mode = #tpu.pipeline_mode<synchronous>, transform_indices = @transform_4, window_bounds = array<i64: 1, 128>}, {pipeline_mode = #tpu.pipeline_mode<synchronous>, transform_indices = @transform_5, window_bounds = array<i64: 32, 128>}]} {
    %c0 = arith.constant 0 : index
    %c0_0 = arith.constant 0 : index
    %0 = vector.load %arg1[%c0, %c0_0] : memref<32x192xbf16, #tpu.memory_space<vmem>>, vector<32x192xbf16>
    %c0_1 = arith.constant 0 : index
    %c0_2 = arith.constant 0 : index
    %1 = vector.load %arg2[%c0_1, %c0_2] : memref<192x128xbf16, #tpu.memory_space<vmem>>, vector<192x128xbf16>
    %cst = arith.constant dense<0.000000e+00> : vector<32x128xf32>
    %2 = tpu.matmul %0, %1, %cst {dimension_numbers = #tpu.dot_dimension_numbers<[1], [0], [0], [1], [0, 0, 1, 1], [], []>} : vector<32x192xbf16>, vector<192x128xbf16>, vector<32x128xf32> -> vector<32x128xf32>
    %c0_3 = arith.constant 0 : index
    %c0_4 = arith.constant 0 : index
    %3 = vector.load %arg3[%c0_3, %c0_4] : memref<1x128xf32, #tpu.memory_space<vmem>>, vector<1x128xf32>
    %4 = vector.broadcast %3 : vector<1x128xf32> to vector<32x128xf32>
    %5 = arith.addf %2, %4 : vector<32x128xf32>
    %cst_5 = arith.constant 0.000000e+00 : f32
    %6 = vector.broadcast %cst_5 : f32 to vector<32x128xf32>
    %7 = arith.maximumf %5, %6 : vector<32x128xf32>
    %8 = tpu.iota {dimensions = array<i32: 0>} : vector<32x1xi32>
    %c16_i32 = arith.constant 16 : i32
    %c0_i32 = arith.constant 0 : i32
    %9 = arith.cmpi eq, %c16_i32, %c0_i32 : i32
    %c1_i32 = arith.constant 1 : i32
    %10 = arith.select %9, %c1_i32, %c16_i32 : i32
    %11 = vector.broadcast %10 : i32 to vector<32x1xi32>
    %12 = arith.remsi %8, %11 : vector<32x1xi32>
    %c0_i32_6 = arith.constant 0 : i32
    %13 = vector.broadcast %c0_i32_6 : i32 to vector<32x1xi32>
    %14 = arith.cmpi ne, %12, %13 : vector<32x1xi32>
    %c0_i32_7 = arith.constant 0 : i32
    %15 = vector.broadcast %c0_i32_7 : i32 to vector<32x1xi32>
    %16 = arith.cmpi slt, %12, %15 : vector<32x1xi32>
    %c0_i32_8 = arith.constant 0 : i32
    %17 = arith.cmpi slt, %10, %c0_i32_8 : i32
    %18 = vector.broadcast %17 : i1 to vector<32x1xi1>
    %19 = vector.broadcast %18 : vector<32x1xi1> to vector<32x1xi1>
    %20 = arith.xori %16, %19 : vector<32x1xi1>
    %21 = arith.andi %20, %14 : vector<32x1xi1>
    %22 = vector.broadcast %10 : i32 to vector<32x1xi32>
    %23 = arith.addi %12, %22 : vector<32x1xi32>
    %24 = arith.select %21, %23, %12 : vector<32x1xi1>, vector<32x1xi32>
    %c1_i32_9 = arith.constant 1 : i32
    %25 = tpu.dynamic_rotate %7 by %c1_i32_9 dim 0 : vector<32x128xf32>, i32 -> vector<32x128xf32>
    %c-1_i32 = arith.constant -1 : i32
    %26 = vector.broadcast %c-1_i32 : i32 to vector<32x1xi32>
    %27 = arith.addi %24, %26 : vector<32x1xi32>
    %c0_i32_10 = arith.constant 0 : i32
    %28 = vector.broadcast %c0_i32_10 : i32 to vector<32x1xi32>
    %29 = arith.cmpi sge, %27, %28 : vector<32x1xi32>
    %c-1_i32_11 = arith.constant -1 : i32
    %30 = vector.broadcast %c-1_i32_11 : i32 to vector<32x1xi32>
    %31 = arith.addi %24, %30 : vector<32x1xi32>
    %c16_i32_12 = arith.constant 16 : i32
    %32 = vector.broadcast %c16_i32_12 : i32 to vector<32x1xi32>
    %33 = arith.cmpi slt, %31, %32 : vector<32x1xi32>
    %34 = arith.andi %29, %33 : vector<32x1xi1>
    %cst_13 = arith.constant 0.000000e+00 : f32
    %35 = vector.shape_cast %34 : vector<32x1xi1> to vector<32x1xi1>
    %36 = vector.broadcast %35 : vector<32x1xi1> to vector<32x128xi1>
    %37 = vector.broadcast %cst_13 : f32 to vector<32x128xf32>
    %38 = arith.select %36, %25, %37 : vector<32x128xi1>, vector<32x128xf32>
    %c31_i32 = arith.constant 31 : i32
    %39 = tpu.dynamic_rotate %7 by %c31_i32 dim 0 : vector<32x128xf32>, i32 -> vector<32x128xf32>
    %c1_i32_14 = arith.constant 1 : i32
    %40 = vector.broadcast %c1_i32_14 : i32 to vector<32x1xi32>
    %41 = arith.addi %24, %40 : vector<32x1xi32>
    %c0_i32_15 = arith.constant 0 : i32
    %42 = vector.broadcast %c0_i32_15 : i32 to vector<32x1xi32>
    %43 = arith.cmpi sge, %41, %42 : vector<32x1xi32>
    %c1_i32_16 = arith.constant 1 : i32
    %44 = vector.broadcast %c1_i32_16 : i32 to vector<32x1xi32>
    %45 = arith.addi %24, %44 : vector<32x1xi32>
    %c16_i32_17 = arith.constant 16 : i32
    %46 = vector.broadcast %c16_i32_17 : i32 to vector<32x1xi32>
    %47 = arith.cmpi slt, %45, %46 : vector<32x1xi32>
    %48 = arith.andi %43, %47 : vector<32x1xi1>
    %cst_18 = arith.constant 0.000000e+00 : f32
    %49 = vector.shape_cast %48 : vector<32x1xi1> to vector<32x1xi1>
    %50 = vector.broadcast %49 : vector<32x1xi1> to vector<32x128xi1>
    %51 = vector.broadcast %cst_18 : f32 to vector<32x128xf32>
    %52 = arith.select %50, %39, %51 : vector<32x128xi1>, vector<32x128xf32>
    %53 = tpu.concatenate %38, %7, %52 in 1 : vector<32x128xf32>, vector<32x128xf32>, vector<32x128xf32> -> vector<32x384xf32>
    %54 = arith.truncf %53 : vector<32x384xf32> to vector<32x384xbf16>
    %55 = vector.extract_strided_slice %0 {offsets = [0, 0], sizes = [32, 128], strides = [1, 1]} : vector<32x192xbf16> to vector<32x128xbf16>
    %56 = tpu.concatenate %54, %55 in 1 : vector<32x384xbf16>, vector<32x128xbf16> -> vector<32x512xbf16>
    %c0_19 = arith.constant 0 : index
    %c0_20 = arith.constant 0 : index
    %57 = vector.load %arg4[%c0_19, %c0_20] : memref<512x128xbf16, #tpu.memory_space<vmem>>, vector<512x128xbf16>
    %cst_21 = arith.constant dense<0.000000e+00> : vector<32x128xf32>
    %58 = tpu.matmul %56, %57, %cst_21 {dimension_numbers = #tpu.dot_dimension_numbers<[1], [0], [0], [1], [0, 0, 1, 1], [], []>} : vector<32x512xbf16>, vector<512x128xbf16>, vector<32x128xf32> -> vector<32x128xf32>
    %c0_22 = arith.constant 0 : index
    %c0_23 = arith.constant 0 : index
    %59 = vector.load %arg5[%c0_22, %c0_23] : memref<1x128xf32, #tpu.memory_space<vmem>>, vector<1x128xf32>
    %60 = vector.broadcast %59 : vector<1x128xf32> to vector<32x128xf32>
    %61 = arith.addf %58, %60 : vector<32x128xf32>
    %cst_24 = arith.constant 0.000000e+00 : f32
    %62 = vector.broadcast %cst_24 : f32 to vector<32x128xf32>
    %63 = arith.maximumf %61, %62 : vector<32x128xf32>
    %c0_25 = arith.constant 0 : index
    %c0_26 = arith.constant 0 : index
    %64 = vector.load %arg6[%c0_25, %c0_26] : memref<32x128xf32, #tpu.memory_space<vmem>>, vector<32x128xf32>
    tpu.vector_store %arg6[%c0_25, %c0_26], %63 {strides = array<i32>} : memref<32x128xf32, #tpu.memory_space<vmem>>, vector<32x128xf32>,
    return
  }
  func.func @transform_0(%arg0: i32) -> (i32, i32) {
    %c0_i32 = arith.constant 0 : i32
    %c0_i32_0 = arith.constant 0 : i32
    %c0_i32_1 = arith.constant 0 : i32
    return %c0_i32, %c0_i32_0 : i32, i32
  }
  func.func @transform_1(%arg0: i32) -> (i32, i32) {
    %c0_i32 = arith.constant 0 : i32
    %c0_i32_0 = arith.constant 0 : i32
    %c0_i32_1 = arith.constant 0 : i32
    return %c0_i32, %c0_i32_0 : i32, i32
  }
  func.func @transform_2(%arg0: i32) -> (i32, i32) {
    %c0_i32 = arith.constant 0 : i32
    %c0_i32_0 = arith.constant 0 : i32
    %c0_i32_1 = arith.constant 0 : i32
    return %c0_i32, %c0_i32_0 : i32, i32
  }
  func.func @transform_3(%arg0: i32) -> (i32, i32) {
    %c0_i32 = arith.constant 0 : i32
    %c0_i32_0 = arith.constant 0 : i32
    %c0_i32_1 = arith.constant 0 : i32
    return %c0_i32, %c0_i32_0 : i32, i32
  }
  func.func @transform_4(%arg0: i32) -> (i32, i32) {
    %c0_i32 = arith.constant 0 : i32
    %c0_i32_0 = arith.constant 0 : i32
    %c0_i32_1 = arith.constant 0 : i32
    return %c0_i32, %c0_i32_0 : i32, i32
  }
  func.func @transform_5(%arg0: i32) -> (i32, i32) {
    %c0_i32 = arith.constant 0 : i32
    %c0_i32_0 = arith.constant 0 : i32
    %c0_i32_1 = arith.constant 0 : i32
    return %c0_i32, %c0_i32_0 : i32, i32
  }
}

</mosaic_0001>

<llo_original>
// kernel: residual_block_rows.1
$region0: #{residual_block_rows.1}
  #allocation0 [shape = 'u32[]', space=smem, size = 0x4, offset = 0x4, fixed_abs, tag = 'smem constant byte address 0x4 - core index']
  #allocation1 [shape = 'u32[144,128]{1,0:T(1,128)}', space=vmem, size = 0x12000, scoped, tag = 'internal scratch']
  %s0 = inlined_call_operand.vmem [shape: bf16[32,192], index: 0, kind: input, shape index: {}]
  %s1 = inlined_call_operand.vmem [shape: bf16[192,128], index: 1, kind: input, shape index: {}]
  %s2 = inlined_call_operand.vmem [shape: f32[1,128], index: 2, kind: input, shape index: {}]
  %s3 = inlined_call_operand.hbm [shape: bf16[512,128], index: 3, kind: input, shape index: {}]
  %s4 = inlined_call_operand.vmem [shape: f32[1,128], index: 4, kind: input, shape index: {}]
  %s5 = inlined_call_operand.hbm [shape: f32[32,128], index: 5, kind: output, shape index: {}]
  %s6 = sld [smem:[#allocation0]]
  $region34: #{residual_block_rows.1} parent=0
    _
  %s8 = ssub.s32 1, %s6
  %s9 = scalar_select 0, %s8, %s6
  $region1: #{residual_block_rows.1} parent=0
    #allocation2 [shape = 'u8[131072]{0}', space=vmem, size = 0x20000, scoped, tag = 'input window, operand 3, single buffered']
    #allocation3 [shape = 's32[1]{0}', space=sflag, size = 0x4, scoped, tag = 'scoped memory for residual_block_rows.1']
    #allocation4 [shape = 's32[1]{0}', space=sflag, size = 0x4, scoped, tag = 'scoped memory for residual_block_rows.1']
    #allocation5 [shape = 'u8[16384]{0}', space=vmem, size = 0x4000, scoped, tag = 'output window, operand 0, single buffered']
    %10 = vsyncpa [#allocation3], 0
    %11 = vsyncpa [#allocation4], 0
    // Predicated region
    $region2: #{residual_block_rows.1} parent=1 // pred_check
      _
    $region3: #{residual_block_rows.1} parent=1 // pred_check_branch
      %13 = sbr.rel (0) target = $region5
    $region4: #{residual_block_rows.1} parent=1 // pred_region
      _
    $region5: #{residual_block_rows.1} parent=1 // pred_fallthru
      _
    // Predicated region
    $region6: #{residual_block_rows.1} parent=1 // pred_check
      _
    $region7: #{residual_block_rows.1} parent=1 // pred_check_branch
      %15 = sbr.rel (0) target = $region9
    $region8: #{residual_block_rows.1} parent=1 // pred_region
      _
    $region9: #{residual_block_rows.1} parent=1 // pred_fallthru
      _
    // Predicated region
    $region10: #{residual_block_rows.1} parent=1 // pred_check
      _
    $region11: #{residual_block_rows.1} parent=1 // pred_check_branch
      %17 = sbr.rel (0) target = $region13
    $region12: #{residual_block_rows.1} parent=1 // pred_region
      _
    $region13: #{residual_block_rows.1} parent=1 // pred_fallthru
      _
    // Predicated region
    $region14: #{residual_block_rows.1} parent=1 // pred_check
      _
    $region15: #{residual_block_rows.1} parent=1 // pred_check_branch
      %19 = sbr.rel (0) target = $region17
    $region16: #{residual_block_rows.1} parent=1 // pred_region
      %s21 = ssub.s32 4096, 4096
      %22 = vsyncadd [#allocation3], %s21
      %s23 = sshll.u32 [#allocation2], 4
      %s24 = int_to_ptr.vmem [resolvable:$true] %s23
      %29 = dma.hbm_to_vmem [thread:$0]  %s3, 4096, %s24, [#allocation3], 64, 64, 4
    $region17: #{residual_block_rows.1} parent=1 // pred_fallthru
      _
    // Predicated region
    $region18: #{residual_block_rows.1} parent=1 // pred_check
      _
    $region19: #{residual_block_rows.1} parent=1 // pred_check_branch
      %31 = sbr.rel (0) target = $region21
    $region20: #{residual_block_rows.1} parent=1 // pred_region
      _
    $region21: #{residual_block_rows.1} parent=1 // pred_fallthru
      _
    // Predicated region
    $region22: #{residual_block_rows.1} parent=1 // pred_check
      _
    $region23: #{residual_block_rows.1} parent=1 // pred_check_branch
      %33 = sbr.rel (0) target = $region25
    $region24: #{residual_block_rows.1} parent=1 // pred_region
      %34 = dma.done [#allocation3], 4096
    $region25: #{residual_block_rows.1} parent=1 // pred_fallthru
      _
    %v36 = vld [vmem:[%s0] sm:$0xff]
    %v37 = vld [vmem:[%s0 + $0x8] sm:$0xff]
    %v38 = vld [vmem:[%s0 + $0x10] sm:$0xff]
    %v39 = vld [vmem:[%s0 + $0x18] sm:$0xff]
    %v40 = vld [vmem:[%s1] sm:$0xf]
    %v41 = vld [vmem:[%s1 + $0x4] sm:$0xf]
    %v42 = vld [vmem:[%s1 + $0x8] sm:$0xf]
    %v43 = vld [vmem:[%s1 + $0xc] sm:$0xf]
    %v44 = vld [vmem:[%s1 + $0x10] sm:$0xf]
    %v45 = vld [vmem:[%s1 + $0x14] sm:$0xf]
    %v46 = vld [vmem:[%s1 + $0x18] sm:$0xf]
    %v47 = vld [vmem:[%s1 + $0x1c] sm:$0xf]
    %v48 = vld [vmem:[%s1 + $0x20] sm:$0xf]
    %v49 = vld [vmem:[%s1 + $0x24] sm:$0xf]
    %v50 = vld [vmem:[%s1 + $0x28] sm:$0xf]
    %v51 = vld [vmem:[%s1 + $0x2c] sm:$0xf]
    %v52 = vld [vmem:[%s1 + $0x30] sm:$0xf]
    %v53 = vld [vmem:[%s1 + $0x34] sm:$0xf]
    %v54 = vld [vmem:[%s1 + $0x38] sm:$0xf]
    %v55 = vld [vmem:[%s1 + $0x3c] sm:$0xf]
    %v56 = vld [vmem:[%s1 + $0x40] sm:$0xf]
    %v57 = vld [vmem:[%s1 + $0x44] sm:$0xf]
    %v58 = vld [vmem:[%s1 + $0x48] sm:$0xf]
    %v59 = vld [vmem:[%s1 + $0x4c] sm:$0xf]
    %v60 = vld [vmem:[%s1 + $0x50] sm:$0xf]
    %v61 = vld [vmem:[%s1 + $0x54] sm:$0xf]
    %v62 = vld [vmem:[%s1 + $0x58] sm:$0xf]
    %v63 = vld [vmem:[%s1 + $0x5c] sm:$0xf]
    %v64 = vld [vmem:[%s2] sm:$0x1]
    %v66 = vlaneseq
    %v67 = vshrl.u32 %v66, 7
    %v68 = vsub.s32 0, %v67
    %v69 = vrot.slane %v64, %v68
    %v75 = vunpack.c.l.b16 %v36
    %v76 = vunpack.c.h.b16 %v36
    %v77 = vunpack.c.l.b16 %v37
    %v78 = vunpack.c.h.b16 %v37
    %v79 = vunpack.c.l.b16 %v38
    %v80 = vunpack.c.h.b16 %v38
    %v81 = vunpack.c.l.b16 %v39
    %v82 = vunpack.c.h.b16 %v39
    %v83 = vpack.c.b16 %v77, %v75
    %v84 = vpack.c.b16 %v78, %v76
    %v85 = vpack.c.b16 %v81, %v79
    %v86 = vpack.c.b16 %v82, %v80
    %v113 = vunpack.c.l.b16 %v40
    %v114 = vunpack.c.l.b16 %v41
    %v115 = vunpack.c.l.b16 %v42
    %v116 = vunpack.c.l.b16 %v43
    %v117 = vunpack.c.l.b16 %v44
    %v118 = vunpack.c.l.b16 %v45
    %v119 = vunpack.c.l.b16 %v46
    %v120 = vunpack.c.l.b16 %v47
    %v121 = vunpack.c.l.b16 %v48
    %v122 = vunpack.c.l.b16 %v49
    %v123 = vunpack.c.l.b16 %v50
    %v124 = vunpack.c.l.b16 %v51
    %v125 = vunpack.c.l.b16 %v52
    %v126 = vunpack.c.l.b16 %v53
    %v127 = vunpack.c.l.b16 %v54
    %v128 = vunpack.c.l.b16 %v55
    %v129 = vunpack.c.l.b16 %v56
    %v130 = vunpack.c.l.b16 %v57
    %v131 = vunpack.c.l.b16 %v58
    %v132 = vunpack.c.l.b16 %v59
    %v133 = vunpack.c.l.b16 %v60
    %v134 = vunpack.c.l.b16 %v61
    %v135 = vunpack.c.l.b16 %v62
    %v136 = vunpack.c.l.b16 %v63
    %v137 = vpack.c.b16 %v114, %v113
    %v138 = vpack.c.b16 %v116, %v115
    %v139 = vpack.c.b16 %v118, %v117
    %v140 = vpack.c.b16 %v120, %v119
    %v141 = vpack.c.b16 %v122, %v121
    %v142 = vpack.c.b16 %v124, %v123
    %v143 = vpack.c.b16 %v126, %v125
    %v144 = vpack.c.b16 %v128, %v127
    %v145 = vpack.c.b16 %v130, %v129
    %v146 = vpack.c.b16 %v132, %v131
    %v147 = vpack.c.b16 %v134, %v133
    %v148 = vpack.c.b16 %v136, %v135
    %vm161 = vcmask 523264
    %v163 = vsel %vm161, %v84, 0
    %v166 = vsel %vm161, %v86, 0
    %168 = vmatprep.subr.bf16.mxu0 0
    %169 = vmatpush1.bf16.msra.mxu0 %v144
    %170 = vmatprep.subr.bf16.mxu0 0
    %171 = vmatpush1.bf16.msra.mxu0 %v143
    %172 = vmatprep.subr.bf16.mxu0 0
    %173 = vmatpush1.bf16.msra.mxu0 %v142
    %174 = vmatprep.subr.bf16.mxu0 0
    %175 = vmatpush1.bf16.msra.mxu0 %v141
    %176 = vmatprep.subr.bf16.mxu0 0
    %177 = vmatpush1.bf16.msra.mxu0 %v140
    %178 = vmatprep.subr.bf16.mxu0 0
    %179 = vmatpush1.bf16.msra.mxu0 %v139
    %180 = vmatprep.subr.bf16.mxu0 0
    %181 = vmatpush1.bf16.msra.mxu0 %v138
    %182 = vmatprep.subr.bf16.mxu0 0
    %183 = vmatpush1.bf16.msra.mxu0 %v137
    %184 = vmatprep.subr.bf16.mxu0 0
    %185 = vmatpush2.bf16.msra.mxu0 0
    %186 = vmatprep.subr.bf16.mxu0 0
    %187 = vmatpush2.bf16.msra.mxu0 0
    %188 = vmatprep.subr.bf16.mxu0 0
    %189 = vmatpush2.bf16.msra.mxu0 0
    %190 = vmatprep.subr.bf16.mxu0 0
    %191 = vmatpush2.bf16.msra.mxu0 0
    %192 = vmatprep.subr.bf16.mxu0 0
    %193 = vmatpush2.bf16.msra.mxu0 %v148
    %194 = vmatprep.subr.bf16.mxu0 0
    %195 = vmatpush2.bf16.msra.mxu0 %v147
    %196 = vmatprep.subr.bf16.mxu0 0
    %197 = vmatpush2.bf16.msra.mxu0 %v146
    %198 = vmatprep.subr.bf16.mxu0 0
    %199 = vmatpush2.bf16.msra.mxu0 %v145
    %200 = vmatprep.mubr.bf16.mxu0 %v163
    %201 = vmatmul.mubr.bf16.gmra.mxu0 %v83
    %v202 = vpop.f32.mrf.mxu0
    %v203 = vadd.f32 %v69, %v202
    %v204 = vpop.f32.mrf.mxu0
    %v205 = vpop.f32.mrf.mxu0
    %v206 = vadd.f32 %v69, %v205
    %v207 = vpop.f32.mrf.mxu0
    %208 = vmatprep.mubr.bf16.mxu0 %v166
    %209 = vmatmul.mubr.bf16.gmra.mxu0 %v85
    %v210 = vpop.f32.mrf.mxu0
    %v211 = vadd.f32 %v69, %v210
    %v212 = vpop.f32.mrf.mxu0
    %v213 = vpop.f32.mrf.mxu0
    %v214 = vadd.f32 %v69, %v213
    %v215 = vpop.f32.mrf.mxu0
    %216 = vdwg.mxu0
    %v217 = vmax.f32 %v203, 0.0
    %v218 = vmax.f32 %v206, 0.0
    %v219 = vmax.f32 %v211, 0.0
    %v220 = vmax.f32 %v214, 0.0
    %v221 = vlaneseq
    %v222 = vshrl.u32 %v221, 7
    %v223 = vadd.s32 %v222, 8
    %v224 = vadd.s32 %v222, 16
    %v225 = vadd.s32 %v222, 24
    %vm226 = vcmp.lt.s32.totalorder %v222, 0
    %v227 = vsub.s32 0, %v222
    %v228 = vsel %vm226, %v227, %v222
    %v229 = vshrl.u32 %v228, 4
    %v230 = vand.u32 %v228, 15
    %v231 = vsub.s32 0, %v230
    %v232 = vsel %vm226, %v231, %v230
    %vm233 = vcmp.lt.s32.totalorder %v223, 0
    %v234 = vsub.s32 0, %v223
    %v235 = vsel %vm233, %v234, %v223
    %v236 = vshrl.u32 %v235, 4
    %v237 = vand.u32 %v235, 15
    %v238 = vsub.s32 0, %v237
    %v239 = vsel %vm233, %v238, %v237
    %vm240 = vcmp.lt.s32.totalorder %v224, 0
    %v241 = vsub.s32 0, %v224
    %v242 = vsel %vm240, %v241, %v224
    %v243 = vshrl.u32 %v242, 4
    %v244 = vand.u32 %v242, 15
    %v245 = vsub.s32 0, %v244
    %v246 = vsel %vm240, %v245, %v244
    %vm247 = vcmp.lt.s32.totalorder %v225, 0
    %v248 = vsub.s32 0, %v225
    %v249 = vsel %vm247, %v248, %v225
    %v250 = vshrl.u32 %v249, 4
    %v251 = vand.u32 %v249, 15
    %v252 = vsub.s32 0, %v251
    %v253 = vsel %vm247, %v252, %v251
    %vm254 = vcmp.ne.s32.totalorder %v232, 0
    %vm255 = vcmp.ne.s32.totalorder %v239, 0
    %vm256 = vcmp.ne.s32.totalorder %v246, 0
    %vm257 = vcmp.ne.s32.totalorder %v253, 0
    %vm258 = vcmp.lt.s32.totalorder %v232, 0
    %vm259 = vcmp.lt.s32.totalorder %v239, 0
    %vm260 = vcmp.lt.s32.totalorder %v246, 0
    %vm261 = vcmp.lt.s32.totalorder %v253, 0
    %vm262 = vmand %vm258, %vm254
    %vm263 = vmand %vm259, %vm255
    %vm264 = vmand %vm260, %vm256
    %vm265 = vmand %vm261, %vm257
    %v266 = vadd.s32 %v232, 16
    %v267 = vadd.s32 %v239, 16
    %v268 = vadd.s32 %v246, 16
    %v269 = vadd.s32 %v253, 16
    %v270 = vsel %vm262, %v266, %v232
    %v271 = vsel %vm263, %v267, %v239
    %v272 = vsel %vm264, %v268, %v246
    %v273 = vsel %vm265, %v269, %v253
    %v274 = vrot.slane %v217, 7
    %v275 = vrot.slane %v218, 7
    %v276 = vrot.slane %v219, 7
    %v277 = vrot.slane %v220, 7
    %vm278 = vcmp.lt.s32.totalorder %v222, 1
    %v279 = vsel %vm278, %v276, %v277
    %v280 = vsel %vm278, %v275, %v276
    %v281 = vsel %vm278, %v274, %v275
    %v282 = vsel %vm278, %v277, %v274
    %v283 = vadd.s32 %v270, 4294967295
    %v284 = vadd.s32 %v271, 4294967295
    %v285 = vadd.s32 %v272, 4294967295
    %v286 = vadd.s32 %v273, 4294967295
    %vm287 = vcmp.ge.s32.totalorder %v283, 0
    %vm288 = vcmp.ge.s32.totalorder %v284, 0
    %vm289 = vcmp.ge.s32.totalorder %v285, 0
    %vm290 = vcmp.ge.s32.totalorder %v286, 0
    %vm291 = vcmp.lt.s32.totalorder %v283, 16
    %vm292 = vcmp.lt.s32.totalorder %v284, 16
    %vm293 = vcmp.lt.s32.totalorder %v285, 16
    %vm294 = vcmp.lt.s32.totalorder %v286, 16
    %vm295 = vmand %vm287, %vm291
    %vm296 = vmand %vm288, %vm292
    %vm297 = vmand %vm289, %vm293
    %vm298 = vmand %vm290, %vm294
    %v299 = vsel %vm295, 1, 0
    %v300 = vsel %vm296, 1, 0
    %v301 = vsel %vm297, 1, 0
    %v302 = vsel %vm298, 1, 0
    %vm303 = vcmp.eq.s32.totalorder %v299, 1
    %vm304 = vcmp.eq.s32.totalorder %v300, 1
    %vm305 = vcmp.eq.s32.totalorder %v301, 1
    %vm306 = vcmp.eq.s32.totalorder %v302, 1
    %v307 = vsel %vm303, %v282, 0.0
    %v308 = vsel %vm304, %v281, 0.0
    %v309 = vsel %vm305, %v280, 0.0
    %v310 = vsel %vm306, %v279, 0.0
    %v311 = vrot.slane %v217, 1
    %v312 = vrot.slane %v218, 1
    %v313 = vrot.slane %v219, 1
    %v314 = vrot.slane %v220, 1
    %vm315 = vcmp.lt.s32.totalorder %v222, 7
    %v316 = vsel %vm315, %v313, %v314
    %v317 = vsel %vm315, %v312, %v313
    %v318 = vsel %vm315, %v311, %v312
    %v319 = vsel %vm315, %v314, %v311
    %v320 = vadd.s32 %v270, 1
    %v321 = vadd.s32 %v271, 1
    %v322 = vadd.s32 %v272, 1
    %v323 = vadd.s32 %v273, 1
    %vm324 = vcmp.ge.s32.totalorder %v320, 0
    %vm325 = vcmp.ge.s32.totalorder %v321, 0
    %vm326 = vcmp.ge.s32.totalorder %v322, 0
    %vm327 = vcmp.ge.s32.totalorder %v323, 0
    %vm328 = vcmp.lt.s32.totalorder %v320, 16
    %vm329 = vcmp.lt.s32.totalorder %v321, 16
    %vm330 = vcmp.lt.s32.totalorder %v322, 16
    %vm331 = vcmp.lt.s32.totalorder %v323, 16
    %vm332 = vmand %vm324, %vm328
    %vm333 = vmand %vm325, %vm329
    %vm334 = vmand %vm326, %vm330
    %vm335 = vmand %vm327, %vm331
    %v336 = vsel %vm332, 1, 0
    %v337 = vsel %vm333, 1, 0
    %v338 = vsel %vm334, 1, 0
    %v339 = vsel %vm335, 1, 0
    %vm340 = vcmp.eq.s32.totalorder %v336, 1
    %vm341 = vcmp.eq.s32.totalorder %v337, 1
    %vm342 = vcmp.eq.s32.totalorder %v338, 1
    %vm343 = vcmp.eq.s32.totalorder %v339, 1
    %v344 = vsel %vm340, %v318, 0.0
    %v345 = vsel %vm341, %v317, 0.0
    %v346 = vsel %vm342, %v316, 0.0
    %v347 = vsel %vm343, %v319, 0.0
    %v348 = vpack.c.bf16 %v308, %v307
    %v349 = vpack.c.bf16 %v218, %v217
    %v350 = vpack.c.bf16 %v345, %v344
    %v351 = vpack.c.bf16 %v310, %v309
    %v352 = vpack.c.bf16 %v220, %v219
    %v353 = vpack.c.bf16 %v347, %v346
    %v354 = vld [vmem:[#allocation2] sm:$0xf]
    %v355 = vld [vmem:[#allocation2 + $0x4] sm:$0xf]
    %v356 = vld [vmem:[#allocation2 + $0x8] sm:$0xf]
    %v357 = vld [vmem:[#allocation2 + $0xc] sm:$0xf]
    %v358 = vld [vmem:[#allocation2 + $0x10] sm:$0xf]
    %v359 = vld [vmem:[#allocation2 + $0x14] sm:$0xf]
    %v360 = vld [vmem:[#allocation2 + $0x18] sm:$0xf]
    %v361 = vld [vmem:[#allocation2 + $0x1c] sm:$0xf]
    %v362 = vld [vmem:[#allocation2 + $0x20] sm:$0xf]
    %v363 = vld [vmem:[#allocation2 + $0x24] sm:$0xf]
    %v364 = vld [vmem:[#allocation2 + $0x28] sm:$0xf]
    %v365 = vld [vmem:[#allocation2 + $0x2c] sm:$0xf]
    %v366 = vld [vmem:[#allocation2 + $0x30] sm:$0xf]
    %v367 = vld [vmem:[#allocation2 + $0x34] sm:$0xf]
    %v368 = vld [vmem:[#allocation2 + $0x38] sm:$0xf]
    %v369 = vld [vmem:[#allocation2 + $0x3c] sm:$0xf]
    %v370 = vld [vmem:[#allocation2 + $0x40] sm:$0xf]
    %v371 = vld [vmem:[#allocation2 + $0x44] sm:$0xf]
    %v372 = vld [vmem:[#allocation2 + $0x48] sm:$0xf]
    %v373 = vld [vmem:[#allocation2 + $0x4c] sm:$0xf]
    %v374 = vld [vmem:[#allocation2 + $0x50] sm:$0xf]
    %v375 = vld [vmem:[#allocation2 + $0x54] sm:$0xf]
    %v376 = vld [vmem:[#allocation2 + $0x58] sm:$0xf]
    %v377 = vld [vmem:[#allocation2 + $0x5c] sm:$0xf]
    %v378 = vld [vmem:[#allocation2 + $0x60] sm:$0xf]
    %v379 = vld [vmem:[#allocation2 + $0x64] sm:$0xf]
    %v380 = vld [vmem:[#allocation2 + $0x68] sm:$0xf]
    %v381 = vld [vmem:[#allocation2 + $0x6c] sm:$0xf]
    %v382 = vld [vmem:[#allocation2 + $0x70] sm:$0xf]
    %v383 = vld [vmem:[#allocation2 + $0x74] sm:$0xf]
    %v384 = vld [vmem:[#allocation2 + $0x78] sm:$0xf]
    %v385 = vld [vmem:[#allocation2 + $0x7c] sm:$0xf]
    %v386 = vld [vmem:[#allocation2 + $0x80] sm:$0xf]
    %v387 = vld [vmem:[#allocation2 + $0x84] sm:$0xf]
    %v388 = vld [vmem:[#allocation2 + $0x88] sm:$0xf]
    %v389 = vld [vmem:[#allocation2 + $0x8c] sm:$0xf]
    %v390 = vld [vmem:[#allocation2 + $0x90] sm:$0xf]
    %v391 = vld [vmem:[#allocation2 + $0x94] sm:$0xf]
    %v392 = vld [vmem:[#allocation2 + $0x98] sm:$0xf]
    %v393 = vld [vmem:[#allocation2 + $0x9c] sm:$0xf]
    %v394 = vld [vmem:[#allocation2 + $0xa0] sm:$0xf]
    %v395 = vld [vmem:[#allocation2 + $0xa4] sm:$0xf]
    %v396 = vld [vmem:[#allocation2 + $0xa8] sm:$0xf]
    %v397 = vld [vmem:[#allocation2 + $0xac] sm:$0xf]
    %v398 = vld [vmem:[#allocation2 + $0xb0] sm:$0xf]
    %v399 = vld [vmem:[#allocation2 + $0xb4] sm:$0xf]
    %v400 = vld [vmem:[#allocation2 + $0xb8] sm:$0xf]
    %v401 = vld [vmem:[#allocation2 + $0xbc] sm:$0xf]
    %v402 = vld [vmem:[#allocation2 + $0xc0] sm:$0xf]
    %v403 = vld [vmem:[#allocation2 + $0xc4] sm:$0xf]
    %v404 = vld [vmem:[#allocation2 + $0xc8] sm:$0xf]
    %v405 = vld [vmem:[#allocation2 + $0xcc] sm:$0xf]
    %v406 = vld [vmem:[#allocation2 + $0xd0] sm:$0xf]
    %v407 = vld [vmem:[#allocation2 + $0xd4] sm:$0xf]
    %v408 = vld [vmem:[#allocation2 + $0xd8] sm:$0xf]
    %v409 = vld [vmem:[#allocation2 + $0xdc] sm:$0xf]
    %v410 = vld [vmem:[#allocation2 + $0xe0] sm:$0xf]
    %v411 = vld [vmem:[#allocation2 + $0xe4] sm:$0xf]
    %v412 = vld [vmem:[#allocation2 + $0xe8] sm:$0xf]
    %v413 = vld [vmem:[#allocation2 + $0xec] sm:$0xf]
    %v414 = vld [vmem:[#allocation2 + $0xf0] sm:$0xf]
    %v415 = vld [vmem:[#allocation2 + $0xf4] sm:$0xf]
    %v416 = vld [vmem:[#allocation2 + $0xf8] sm:$0xf]
    %v417 = vld [vmem:[#allocation2 + $0xfc] sm:$0xf]
    %v418 = vld [vmem:[%s4] sm:$0x1]
    %v420 = vlaneseq
    %v421 = vshrl.u32 %v420, 7
    %v422 = vsub.s32 0, %v421
    %v423 = vrot.slane %v418, %v422
    %v489 = vunpack.c.l.b16 %v354
    %v490 = vunpack.c.l.b16 %v355
    %v491 = vunpack.c.l.b16 %v356
    %v492 = vunpack.c.l.b16 %v357
    %v493 = vunpack.c.l.b16 %v358
    %v494 = vunpack.c.l.b16 %v359
    %v495 = vunpack.c.l.b16 %v360
    %v496 = vunpack.c.l.b16 %v361
    %v497 = vunpack.c.l.b16 %v362
    %v498 = vunpack.c.l.b16 %v363
    %v499 = vunpack.c.l.b16 %v364
    %v500 = vunpack.c.l.b16 %v365
    %v501 = vunpack.c.l.b16 %v366
    %v502 = vunpack.c.l.b16 %v367
    %v503 = vunpack.c.l.b16 %v368
    %v504 = vunpack.c.l.b16 %v369
    %v505 = vunpack.c.l.b16 %v370
    %v506 = vunpack.c.l.b16 %v371
    %v507 = vunpack.c.l.b16 %v372
    %v508 = vunpack.c.l.b16 %v373
    %v509 = vunpack.c.l.b16 %v374
    %v510 = vunpack.c.l.b16 %v375
    %v511 = vunpack.c.l.b16 %v376
    %v512 = vunpack.c.l.b16 %v377
    %v513 = vunpack.c.l.b16 %v378
    %v514 = vunpack.c.l.b16 %v379
    %v515 = vunpack.c.l.b16 %v380
    %v516 = vunpack.c.l.b16 %v381
    %v517 = vunpack.c.l.b16 %v382
    %v518 = vunpack.c.l.b16 %v383
    %v519 = vunpack.c.l.b16 %v384
    %v520 = vunpack.c.l.b16 %v385
    %v521 = vunpack.c.l.b16 %v386
    %v522 = vunpack.c.l.b16 %v387
    %v523 = vunpack.c.l.b16 %v388
    %v524 = vunpack.c.l.b16 %v389
    %v525 = vunpack.c.l.b16 %v390
    %v526 = vunpack.c.l.b16 %v391
    %v527 = vunpack.c.l.b16 %v392
    %v528 = vunpack.c.l.b16 %v393
    %v529 = vunpack.c.l.b16 %v394
    %v530 = vunpack.c.l.b16 %v395
    %v531 = vunpack.c.l.b16 %v396
    %v532 = vunpack.c.l.b16 %v397
    %v533 = vunpack.c.l.b16 %v398
    %v534 = vunpack.c.l.b16 %v399
    %v535 = vunpack.c.l.b16 %v400
    %v536 = vunpack.c.l.b16 %v401
    %v537 = vunpack.c.l.b16 %v402
    %v538 = vunpack.c.l.b16 %v403
    %v539 = vunpack.c.l.b16 %v404
    %v540 = vunpack.c.l.b16 %v405
    %v541 = vunpack.c.l.b16 %v406
    %v542 = vunpack.c.l.b16 %v407
    %v543 = vunpack.c.l.b16 %v408
    %v544 = vunpack.c.l.b16 %v409
    %v545 = vunpack.c.l.b16 %v410
    %v546 = vunpack.c.l.b16 %v411
    %v547 = vunpack.c.l.b16 %v412
    %v548 = vunpack.c.l.b16 %v413
    %v549 = vunpack.c.l.b16 %v414
    %v550 = vunpack.c.l.b16 %v415
    %v551 = vunpack.c.l.b16 %v416
    %v552 = vunpack.c.l.b16 %v417
    %v553 = vpack.c.b16 %v490, %v489
    %v554 = vpack.c.b16 %v492, %v491
    %v555 = vpack.c.b16 %v494, %v493
    %v556 = vpack.c.b16 %v496, %v495
    %v557 = vpack.c.b16 %v498, %v497
    %v558 = vpack.c.b16 %v500, %v499
    %v559 = vpack.c.b16 %v502, %v501
    %v560 = vpack.c.b16 %v504, %v503
    %v561 = vpack.c.b16 %v506, %v505
    %v562 = vpack.c.b16 %v508, %v507
    %v563 = vpack.c.b16 %v510, %v509
    %v564 = vpack.c.b16 %v512, %v511
    %v565 = vpack.c.b16 %v514, %v513
    %v566 = vpack.c.b16 %v516, %v515
    %v567 = vpack.c.b16 %v518, %v517
    %v568 = vpack.c.b16 %v520, %v519
    %v569 = vpack.c.b16 %v522, %v521
    %v570 = vpack.c.b16 %v524, %v523
    %v571 = vpack.c.b16 %v526, %v525
    %v572 = vpack.c.b16 %v528, %v527
    %v573 = vpack.c.b16 %v530, %v529
    %v574 = vpack.c.b16 %v532, %v531
    %v575 = vpack.c.b16 %v534, %v533
    %v576 = vpack.c.b16 %v536, %v535
    %v577 = vpack.c.b16 %v538, %v537
    %v578 = vpack.c.b16 %v540, %v539
    %v579 = vpack.c.b16 %v542, %v541
    %v580 = vpack.c.b16 %v544, %v543
    %v581 = vpack.c.b16 %v546, %v545
    %v582 = vpack.c.b16 %v548, %v547
    %v583 = vpack.c.b16 %v550, %v549
    %v584 = vpack.c.b16 %v552, %v551
    %617 = vmatprep.subr.bf16.mxu0 0
    %618 = vmatpush1.bf16.msra.mxu0 %v560
    %619 = vmatprep.subr.bf16.mxu0 0
    %620 = vmatpush1.bf16.msra.mxu0 %v559
    %621 = vmatprep.subr.bf16.mxu0 0
    %622 = vmatpush1.bf16.msra.mxu0 %v558
    %623 = vmatprep.subr.bf16.mxu0 0
    %624 = vmatpush1.bf16.msra.mxu0 %v557
    %625 = vmatprep.subr.bf16.mxu0 0
    %626 = vmatpush1.bf16.msra.mxu0 %v556
    %627 = vmatprep.subr.bf16.mxu0 0
    %628 = vmatpush1.bf16.msra.mxu0 %v555
    %629 = vmatprep.subr.bf16.mxu0 0
    %630 = vmatpush1.bf16.msra.mxu0 %v554
    %631 = vmatprep.subr.bf16.mxu0 0
    %632 = vmatpush1.bf16.msra.mxu0 %v553
    %633 = vmatprep.subr.bf16.mxu0 0
    %634 = vmatpush2.bf16.msra.mxu0 %v568
    %635 = vmatprep.subr.bf16.mxu0 0
    %636 = vmatpush2.bf16.msra.mxu0 %v567
    %637 = vmatprep.subr.bf16.mxu0 0
    %638 = vmatpush2.bf16.msra.mxu0 %v566
    %639 = vmatprep.subr.bf16.mxu0 0
    %640 = vmatpush2.bf16.msra.mxu0 %v565
    %641 = vmatprep.subr.bf16.mxu0 0
    %642 = vmatpush2.bf16.msra.mxu0 %v564
    %643 = vmatprep.subr.bf16.mxu0 0
    %644 = vmatpush2.bf16.msra.mxu0 %v563
    %645 = vmatprep.subr.bf16.mxu0 0
    %646 = vmatpush2.bf16.msra.mxu0 %v562
    %647 = vmatprep.subr.bf16.mxu0 0
    %648 = vmatpush2.bf16.msra.mxu0 %v561
    %649 = vmatprep.mubr.bf16.mxu0 %v349
    %650 = vmatmul.mubr.bf16.gmra.mxu0 %v348
    %v651 = vpop.f32.mrf.mxu0
    %v652 = vadd.f32 %v423, %v651
    %v653 = vpop.f32.mrf.mxu0
    %v654 = vpop.f32.mrf.mxu0
    %v655 = vadd.f32 %v423, %v654
    %v656 = vpop.f32.mrf.mxu0
    %657 = vmatprep.mubr.bf16.mxu0 %v352
    %658 = vmatmul.mubr.bf16.gmra.mxu0 %v351
    %v659 = vpop.f32.mrf.mxu0
    %v660 = vadd.f32 %v423, %v659
    %v661 = vpop.f32.mrf.mxu0
    %v662 = vpop.f32.mrf.mxu0
    %v663 = vadd.f32 %v423, %v662
    %v664 = vpop.f32.mrf.mxu0
    %665 = vdwg.mxu0
    %666 = vmatprep.subr.bf16.mxu0 0
    %667 = vmatpush1.bf16.msra.mxu0 %v576
    %668 = vmatprep.subr.bf16.mxu0 0
    %669 = vmatpush1.bf16.msra.mxu0 %v575
    %670 = vmatprep.subr.bf16.mxu0 0
    %671 = vmatpush1.bf16.msra.mxu0 %v574
    %672 = vmatprep.subr.bf16.mxu0 0
    %673 = vmatpush1.bf16.msra.mxu0 %v573
    %674 = vmatprep.subr.bf16.mxu0 0
    %675 = vmatpush1.bf16.msra.mxu0 %v572
    %676 = vmatprep.subr.bf16.mxu0 0
    %677 = vmatpush1.bf16.msra.mxu0 %v571
    %678 = vmatprep.subr.bf16.mxu0 0
    %679 = vmatpush1.bf16.msra.mxu0 %v570
    %680 = vmatprep.subr.bf16.mxu0 0
    %681 = vmatpush1.bf16.msra.mxu0 %v569
    %682 = vmatprep.subr.bf16.mxu0 0
    %683 = vmatpush2.bf16.msra.mxu0 %v584
    %684 = vmatprep.subr.bf16.mxu0 0
    %685 = vmatpush2.bf16.msra.mxu0 %v583
    %686 = vmatprep.subr.bf16.mxu0 0
    %687 = vmatpush2.bf16.msra.mxu0 %v582
    %688 = vmatprep.subr.bf16.mxu0 0
    %689 = vmatpush2.bf16.msra.mxu0 %v581
    %690 = vmatprep.subr.bf16.mxu0 0
    %691 = vmatpush2.bf16.msra.mxu0 %v580
    %692 = vmatprep.subr.bf16.mxu0 0
    %693 = vmatpush2.bf16.msra.mxu0 %v579
    %694 = vmatprep.subr.bf16.mxu0 0
    %695 = vmatpush2.bf16.msra.mxu0 %v578
    %696 = vmatprep.subr.bf16.mxu0 0
    %697 = vmatpush2.bf16.msra.mxu0 %v577
    %698 = vmatprep.mubr.bf16.mxu0 %v83
    %699 = vmatmul.mubr.bf16.gmra.mxu0 %v350
    %v700 = vpop.f32.mrf.mxu0
    %v701 = vadd.f32 %v652, %v700
    %v702 = vpop.f32.mrf.mxu0
    %v703 = vpop.f32.mrf.mxu0
    %v704 = vadd.f32 %v655, %v703
    %v705 = vpop.f32.mrf.mxu0
    %706 = vmatprep.mubr.bf16.mxu0 %v85
    %707 = vmatmul.mubr.bf16.gmra.mxu0 %v353
    %v708 = vpop.f32.mrf.mxu0
    %v709 = vadd.f32 %v660, %v708
    %v710 = vpop.f32.mrf.mxu0
    %v711 = vpop.f32.mrf.mxu0
    %v712 = vadd.f32 %v663, %v711
    %v713 = vpop.f32.mrf.mxu0
    %714 = vdwg.mxu0
    %v715 = vmax.f32 %v701, 0.0
    %v716 = vmax.f32 %v704, 0.0
    %v717 = vmax.f32 %v709, 0.0
    %v718 = vmax.f32 %v712, 0.0
    %719 = vst [vmem:[#allocation5] sm:$0xff] %v715
    %720 = vst [vmem:[#allocation5 + $0x8] sm:$0xff] %v716
    %721 = vst [vmem:[#allocation5 + $0x10] sm:$0xff] %v717
    %722 = vst [vmem:[#allocation5 + $0x18] sm:$0xff] %v718
    // Predicated region
    $region26: #{residual_block_rows.1} parent=1 // pred_check
      _
    $region27: #{residual_block_rows.1} parent=1 // pred_check_branch
      %724 = sbr.rel (0) target = $region29
    $region28: #{residual_block_rows.1} parent=1 // pred_region
      %s726 = ssub.s32 512, 512
      %727 = vsyncadd [#allocation4], %s726
      %s728 = sshll.u32 [#allocation5], 4
      %s729 = int_to_ptr.vmem [resolvable:$true] %s728
      %734 = dma.vmem_to_hbm [thread:$0]  %s729, 512, %s5, [#allocation4], 128, 128, 8
    $region29: #{residual_block_rows.1} parent=1 // pred_fallthru
      _
    // Predicated region
    $region30: #{residual_block_rows.1} parent=1 // pred_check
      _
    $region31: #{residual_block_rows.1} parent=1 // pred_check_branch
      %736 = sbr.rel (0) target = $region33
    $region32: #{residual_block_rows.1} parent=1 // pred_region
      %737 = dma.done [#allocation4], 512
    $region33: #{residual_block_rows.1} parent=1 // pred_fallthru
      _
    %738 = vsyncpa [#allocation3], 1
    %739 = vsyncpa [#allocation4], 1

</llo_original>
